<compile_context>
chip_gen: v7x
topology: tpu7x:2x2x1
jax: 0.10.0
libtpu: 0.0.40
codegen_flags: <defaults>
</compile_context>

<pallas_src>
import functools
import math

import jax
import jax.numpy as jnp
from jax.experimental import pallas as pl
from jax.experimental.pallas import tpu as pltpu

_TARGET_BLOCK_BYTES = 2 << 20          # ~2 MiB blocks: 85%+ HBM roofline, fits all gens
_VMEM_LIMIT_BYTES = 32 * 1024 * 1024   # explicit limit for reduction paths (f32 temps)


# ----------------------------- small helpers ------------------------------------
def _sublane_align(dtype):
    """Sublane packing for a dtype: 8 for f32, 16 for bf16, 32 for int8/fp8."""
    return max(8, 32 // max(jnp.dtype(dtype).itemsize, 1))


def _lowest_value(dtype):
    dtype = jnp.dtype(dtype)
    if jnp.issubdtype(dtype, jnp.floating):
        return -jnp.inf
    if dtype == jnp.bool_:
        return False
    return jnp.iinfo(dtype).min


def _cmp_cast(x):
    """Comparison dtype for argmax: f32 for floats, i32 for ints/bool."""
    if jnp.issubdtype(x.dtype, jnp.floating):
        return x.astype(jnp.float32)
    return x.astype(jnp.int32)


def _choose_row_tile(total_rows, bytes_per_row, target_bytes=_TARGET_BLOCK_BYTES,
                     align=8, min_blocks=2):
    """Row-tile size: ~target_bytes/block, multiple of `align` (or the full dim).

    Caps the tile so the grid has >= min_blocks steps when the array is big
    enough (pipelining + v7x megacore sharding).
    """
    total_rows = max(int(total_rows), 1)
    bytes_per_row = max(int(bytes_per_row), 1)
    t = max(1, target_bytes // bytes_per_row)
    if min_blocks > 1 and total_rows >= min_blocks * align:
        t = min(t, -(-total_rows // min_blocks))      # ceil(total_rows / min_blocks)
    if t >= total_rows:
        return total_rows
    t = max(align, (t // align) * align)
    return min(t, total_rows)


def _lane_dense_2d_padded(x, pad_value):
    """Flatten to a lane-dense 2-D (rows, cols) view (cols a multiple of 128 or
    >=128), padding the tail with `pad_value` if needed.  Returns (x2, total)."""
    flat = x.reshape(-1)
    total = int(flat.size)
    for c in (1024, 512, 256, 128):
        if total % c == 0:
            return flat.reshape(total // c, c), total
    last = x.shape[-1] if x.ndim >= 1 else total
    if last >= 128:                                   # already lane-dense-ish, no copy
        return x.reshape(total // last, last), total
    c = 128
    pad = (-total) % c
    flat = jnp.pad(flat, (0, pad), constant_values=pad_value)
    return flat.reshape((total + pad) // c, c), total


def _split_at_dim(shape, dim):
    a = math.prod(shape[:dim]) if dim > 0 else 1
    r = shape[dim]
    b = math.prod(shape[dim + 1:]) if dim + 1 < len(shape) else 1
    return a, r, b


# ----------------------------- elementwise path ---------------------------------
def _elementwise_kernel(fn, x_ref, o_ref):
    o_ref[...] = fn(x_ref[...]).astype(o_ref.dtype)


def _apply_elementwise(x, fn):
    if x.size == 0:
        return x
    orig_shape = x.shape
    x2, total = _lane_dense_2d_padded(x, 0)
    rows, cols = x2.shape
    itemsize = jnp.dtype(x2.dtype).itemsize
    tr = _choose_row_tile(rows, cols * itemsize, align=_sublane_align(x2.dtype))
    out = pl.pallas_call(
        functools.partial(_elementwise_kernel, fn),
        out_shape=jax.ShapeDtypeStruct((rows, cols), x2.dtype),
        grid=(pl.cdiv(rows, tr),),
        in_specs=[pl.BlockSpec((tr, cols), lambda i: (i, 0))],
        out_specs=pl.BlockSpec((tr, cols), lambda i: (i, 0)),
        compiler_params=pltpu.CompilerParams(dimension_semantics=("parallel",)),
    )(x2)
    if rows * cols != total:
        out = out.reshape(-1)[:total]
    return out.reshape(orig_shape)


# -------------------- last-axis (lane) reduction kernels -------------------------
def _softmax_last_kernel(x_ref, o_ref):
    x = x_ref[...].astype(jnp.float32)                      # (TR, W)
    m = jnp.max(x, axis=-1, keepdims=True)
    e = jnp.exp(x - m)
    s = jnp.sum(e, axis=-1, keepdims=True)
    # approx=False keeps numerical parity with the torch/XLA reference; this
    # kernel is HBM-bound so the extra EUP precision is free.
    o_ref[...] = (e * pl.reciprocal(s, approx=False)).astype(o_ref.dtype)


def _logsoftmax_last_kernel(x_ref, o_ref):
    x = x_ref[...].astype(jnp.float32)                      # (TR, W)
    m = jnp.max(x, axis=-1, keepdims=True)
    sh = x - m
    lse = jnp.log(jnp.sum(jnp.exp(sh), axis=-1, keepdims=True))
    o_ref[...] = (sh - lse).astype(o_ref.dtype)


def _argmax_last_kernel(x_ref, o_ref):
    x = _cmp_cast(x_ref[...])                               # (TR, W)
    w = x.shape[-1]
    m = jnp.max(x, axis=-1, keepdims=True)
    idx = jax.lax.broadcasted_iota(jnp.int32, x.shape, 1)
    cand = jnp.where(x == m, idx, w)                        # first max index
    o_ref[...] = jnp.min(cand, axis=-1, keepdims=True).astype(o_ref.dtype)


def _rowmax_rowargmax_kernel(x_ref, m_ref, i_ref):
    """Stage 1 of flat argmax: per-row (max, argmax) over the lane axis."""
    x = _cmp_cast(x_ref[...])                               # (TR, C)
    c = x.shape[-1]
    m = jnp.max(x, axis=-1, keepdims=True)
    idx = jax.lax.broadcasted_iota(jnp.int32, x.shape, 1)
    cand = jnp.where(x == m, idx, c)
    m_ref[...] = m.astype(m_ref.dtype)
    i_ref[...] = jnp.min(cand, axis=-1, keepdims=True).astype(i_ref.dtype)


def _run_last_axis(kernel, x, out_dtype, keep_reduce_axis):
    lead, w = x.shape[:-1], x.shape[-1]
    rows = math.prod(lead) if lead else 1
    x2 = x.reshape(rows, w)
    itemsize = jnp.dtype(x.dtype).itemsize
    tr = _choose_row_tile(rows, w * itemsize, align=_sublane_align(x.dtype))
    if keep_reduce_axis:
        out_shape = jax.ShapeDtypeStruct((rows, w), out_dtype)
        out_spec = pl.BlockSpec((tr, w), lambda i: (i, 0))
    else:
        out_shape = jax.ShapeDtypeStruct((rows, 1), out_dtype)
        out_spec = pl.BlockSpec((tr, 1), lambda i: (i, 0))
    out = pl.pallas_call(
        kernel,
        out_shape=out_shape,
        grid=(pl.cdiv(rows, tr),),
        in_specs=[pl.BlockSpec((tr, w), lambda i: (i, 0))],
        out_specs=out_spec,
        compiler_params=pltpu.CompilerParams(
            dimension_semantics=("parallel",),
            vmem_limit_bytes=_VMEM_LIMIT_BYTES),
    )(x2)
    if keep_reduce_axis:
        return out.reshape(x.shape)
    return out.reshape(lead)


# -------------------- middle-axis (sublane) reduction kernels --------------------
def _softmax_mid_kernel(x_ref, o_ref):
    x = x_ref[...].astype(jnp.float32)                      # (tA, R, tB)
    m = jnp.max(x, axis=1, keepdims=True)
    e = jnp.exp(x - m)
    s = jnp.sum(e, axis=1, keepdims=True)
    o_ref[...] = (e * pl.reciprocal(s, approx=False)).astype(o_ref.dtype)


def _logsoftmax_mid_kernel(x_ref, o_ref):
    x = x_ref[...].astype(jnp.float32)                      # (tA, R, tB)
    m = jnp.max(x, axis=1, keepdims=True)
    sh = x - m
    lse = jnp.log(jnp.sum(jnp.exp(sh), axis=1, keepdims=True))
    o_ref[...] = (sh - lse).astype(o_ref.dtype)


def _argmax_mid_kernel(x_ref, o_ref):
    x = _cmp_cast(x_ref[...])                               # (tA, R, tB)
    r = x.shape[1]
    m = jnp.max(x, axis=1, keepdims=True)
    idx = jax.lax.broadcasted_iota(jnp.int32, x.shape, 1)
    cand = jnp.where(x == m, idx, r)                        # first max index
    o_ref[...] = jnp.min(cand, axis=1, keepdims=True).astype(o_ref.dtype)   # (tA,1,tB)


def _run_mid_axis(kernel, x, dim, out_dtype, keep_reduce_axis):
    a, r, b = _split_at_dim(x.shape, dim)
    x3 = x.reshape(a, r, b)                                 # pure reshape, no transpose
    itemsize = jnp.dtype(x.dtype).itemsize
    target = _TARGET_BLOCK_BYTES

    # Lane tile over b (not reduced -> tiling it is free): multiple of 128 or
    # the full dim.  Bounds VMEM no matter how large C*H*W is (v7x: 64 MiB).
    if b > 128:
        tb = max(128, (target // max(r * itemsize, 1)) // 128 * 128)
        tb = min(tb, b)
    else:
        tb = b

    # First dim of a 3-D block is not (8,128)-constrained, so ta may be 1.
    ta = max(1, min(a, target // max(r * tb * itemsize, 1)))

    # Prefer >= 2 grid steps so the launch pipelines / shards across TCs.
    if ta >= a and tb >= b:
        if a > 1:
            ta = -(-a // 2)
        elif b >= 256:
            half = ((-(-b // 2) + 127) // 128) * 128
            if half < b:
                tb = half

    grid = (pl.cdiv(a, ta), pl.cdiv(b, tb))
    in_spec = pl.BlockSpec((ta, r, tb), lambda i, j: (i, 0, j))
    if keep_reduce_axis:
        out_shape = jax.ShapeDtypeStruct((a, r, b), out_dtype)
        out_spec = pl.BlockSpec((ta, r, tb), lambda i, j: (i, 0, j))
    else:
        # Keep the output 3-D (a, 1, b): its last two block dims (1, tb) satisfy
        # the (8,128) rule while the leading ta stays unconstrained & lane-dense.
        out_shape = jax.ShapeDtypeStruct((a, 1, b), out_dtype)
        out_spec = pl.BlockSpec((ta, 1, tb), lambda i, j: (i, 0, j))

    out = pl.pallas_call(
        kernel,
        out_shape=out_shape,
        grid=grid,
        in_specs=[in_spec],
        out_specs=out_spec,
        compiler_params=pltpu.CompilerParams(
            dimension_semantics=("parallel", "parallel"),
            vmem_limit_bytes=_VMEM_LIMIT_BYTES),
    )(x3)
    if keep_reduce_axis:
        return out.reshape(x.shape)
    return out.reshape(x.shape[:dim] + x.shape[dim + 1:])


# ------------------------- flat (dim=None) argmax --------------------------------
def _argmax_flat(x):
    """Two-stage parallel argmax over the whole tensor (first occurrence wins)."""
    # TODO(synk): PyTorch argmax returns int64; int32 flat index overflows for
    # tensors with > 2^31-1 elements.
    x2, total = _lane_dense_2d_padded(x, _lowest_value(x.dtype))
    rows, cols = x2.shape
    itemsize = jnp.dtype(x2.dtype).itemsize
    cmp_dtype = jnp.float32 if jnp.issubdtype(x2.dtype, jnp.floating) else jnp.int32
    tr = _choose_row_tile(rows, cols * itemsize, align=_sublane_align(x2.dtype))

    # Stage 1: per-row (max, argmax) pairs; fully parallel grid (both v7x TCs).
    row_max, row_arg = pl.pallas_call(
        _rowmax_rowargmax_kernel,
        out_shape=(jax.ShapeDtypeStruct((rows, 1), cmp_dtype),
                   jax.ShapeDtypeStruct((rows, 1), jnp.int32)),
        grid=(pl.cdiv(rows, tr),),
        in_specs=[pl.BlockSpec((tr, cols), lambda i: (i, 0))],
        out_specs=(pl.BlockSpec((tr, 1), lambda i: (i, 0)),
                   pl.BlockSpec((tr, 1), lambda i: (i, 0))),
        compiler_params=pltpu.CompilerParams(
            dimension_semantics=("parallel",),
            vmem_limit_bytes=_VMEM_LIMIT_BYTES),
    )(x2)

    # Stage 2: tiny final reduce over (rows,) arrays in plain JAX.
    row_max = row_max.reshape(-1)
    row_arg = row_arg.reshape(-1)
    best_row = jnp.argmax(row_max)                          # first row hitting the max
    flat_idx = best_row.astype(jnp.int32) * jnp.int32(cols) + row_arg[best_row]
    return flat_idx.astype(jnp.int32)                       # scalar ()


# --------------------------------- dispatchers -----------------------------------
def _softmax(x, dim, log=False):
    dim = dim % x.ndim
    last_kern = _logsoftmax_last_kernel if log else _softmax_last_kernel
    mid_kern = _logsoftmax_mid_kernel if log else _softmax_mid_kernel
    if dim == x.ndim - 1:
        w = x.shape[-1]
        lead = math.prod(x.shape[:-1]) if x.ndim > 1 else 1
        if w < 128 and lead >= 128:
            # Small lane width: one XLA transpose puts the wide remainder on
            # lanes, then the sublane-reduce kernel runs on lane-dense blocks.
            xt = jnp.moveaxis(x, -1, 0)
            out = _run_mid_axis(mid_kern, xt, 0, x.dtype, keep_reduce_axis=True)
            return jnp.moveaxis(out, 0, -1)
        return _run_last_axis(last_kern, x, x.dtype, keep_reduce_axis=True)
    return _run_mid_axis(mid_kern, x, dim, x.dtype, keep_reduce_axis=True)


def _argmax(x, dim):
    # TODO(synk): PyTorch argmax returns int64 indices; the TPU kernel emits int32.
    if dim is None:
        return _argmax_flat(x)
    dim = dim % x.ndim
    if dim == x.ndim - 1:
        w = x.shape[-1]
        lead = math.prod(x.shape[:-1]) if x.ndim > 1 else 1
        if w < 128 and lead >= 128:
            xt = jnp.moveaxis(x, -1, 0)
            return _run_mid_axis(_argmax_mid_kernel, xt, 0, jnp.int32,
                                 keep_reduce_axis=False)
        return _run_last_axis(_argmax_last_kernel, x, jnp.int32, keep_reduce_axis=False)
    return _run_mid_axis(_argmax_mid_kernel, x, dim, jnp.int32, keep_reduce_axis=False)


def _torch_default_softmax_dim(ndim):
    # mirrors torch.nn.functional._get_softmax_dim legacy behavior
    return 0 if ndim in (0, 1, 3) else 1


# ----------------------------------- module --------------------------------------
class Activation:
    """JAX/Pallas port of models/UViT/UViT_modified.py::Activation."""

    def __init__(self, name, **params):
        if name is None or name == 'identity':
            self._fn = lambda x: x                            # no-op: no kernel, no copy
        elif name == 'sigmoid':
            self._fn = lambda x: _apply_elementwise(x, jax.nn.sigmoid)
        elif name == 'softmax2d':
            self._fn = lambda x: _softmax(x, dim=1, log=False)
        elif name == 'softmax':
            dim = params.get('dim', None)
            self._fn = lambda x: _softmax(
                x, dim if dim is not None else _torch_default_softmax_dim(x.ndim),
                log=False)
        elif name == 'logsoftmax':
            dim = params.get('dim', None)
            self._fn = lambda x: _softmax(
                x, dim if dim is not None else _torch_default_softmax_dim(x.ndim),
                log=True)
        elif name == 'tanh':
            self._fn = lambda x: _apply_elementwise(x, jnp.tanh)
        elif name == 'argmax':
            dim = params.get('dim', None)
            self._fn = lambda x: _argmax(x, dim)
        elif name == 'argmax2d':
            self._fn = lambda x: _argmax(x, 1)
        elif name == 'clamp':
            mn = params.get('min', None)
            mx = params.get('max', None)
            self._fn = lambda x: _apply_elementwise(x, lambda v: jnp.clip(v, mn, mx))
        elif callable(name):
            # TODO(synk): user-supplied activation factory runs as plain JAX
            # (cannot be generically lowered into a Pallas kernel).
            self._fn = name(**params)
        else:
            raise ValueError(
                f'Activation should be callable/sigmoid/softmax/logsoftmax/tanh/'
                f'argmax/argmax2d/clamp/None; got {name}')

    def __call__(self, x):
        return self._fn(x)


# ------------------------------------ test ---------------------------------------
if __name__ == "__main__":
    key = jax.random.PRNGKey(0)
    k1, k2, k3 = jax.random.split(key, 3)
    x = jax.random.normal(k1, (2, 4, 16, 16), dtype=jnp.float32)   # NCHW
    y = jax.random.normal(k2, (4, 8, 256), dtype=jnp.float32)      # wide last axis (>=128)
    z = jax.random.normal(k3, (3, 5, 7), dtype=jnp.float32)        # awkward size -> pad path
    xb = x.astype(jnp.bfloat16)

    def check(name, got, ref, atol=2e-5):
        got = jax.block_until_ready(got)
        assert got.shape == ref.shape, (name, got.shape, ref.shape)
        assert jnp.allclose(got, ref, atol=atol, rtol=atol), name

    # identity / elementwise
    check("identity", Activation('identity')(x), x)
    check("sigmoid", Activation('sigmoid')(x), jax.nn.sigmoid(x))
    check("tanh", Activation('tanh')(x), jnp.tanh(x))
    check("tanh_pad", Activation('tanh')(z), jnp.tanh(z))
    check("clamp", Activation('clamp', min=-0.5, max=0.5)(x), jnp.clip(x, -0.5, 0.5))
    check("sigmoid_bf16", Activation('sigmoid')(xb).astype(jnp.float32),
          jax.nn.sigmoid(x), atol=2e-2)

    # softmax family
    check("softmax2d", Activation('softmax2d')(x), jax.nn.softmax(x, axis=1))
    check("softmax_last_small_w", Activation('softmax', dim=-1)(x),
          jax.nn.softmax(x, axis=-1))
    check("softmax_mid", Activation('softmax', dim=2)(x), jax.nn.softmax(x, axis=2))
    check("softmax_last_wide", Activation('softmax', dim=-1)(y),
          jax.nn.softmax(y, axis=-1))
    check("logsoftmax", Activation('logsoftmax', dim=1)(x),
          jax.nn.log_softmax(x, axis=1))

    # argmax family (kernel emits int32; compare as float)
    check("argmax2d", Activation('argmax2d')(x).astype(jnp.float32),
          jnp.argmax(x, axis=1).astype(jnp.float32))
    check("argmax_last_small_w", Activation('argmax', dim=-1)(x).astype(jnp.float32),
          jnp.argmax(x, axis=-1).astype(jnp.float32))
    check("argmax_last_wide", Activation('argmax', dim=-1)(y).astype(jnp.float32),
          jnp.argmax(y, axis=-1).astype(jnp.float32))
    check("argmax_flat", Activation('argmax')(x).astype(jnp.float32),
          jnp.argmax(x).astype(jnp.float32))

    print("KERNEL_OK")
</pallas_src>

<mosaic_0001>
module attributes {stable_mosaic.version = 11 : i64} {
  func.func @_elementwise_kernel(%arg0: i32, %arg1: memref<2x1024xf32, #tpu.memory_space<vmem>>, %arg2: memref<2x1024xf32, #tpu.memory_space<vmem>>) attributes {dimension_semantics = [#tpu.dimension_semantics<parallel>], iteration_bounds = array<i64: 1>, scalar_prefetch = 0 : i64, scratch_operands = 0 : i64, tpu.core_type = #tpu.core_type<tc>, window_params = [{transform_indices = @transform_0, window_bounds = array<i64: 2, 1024>}, {transform_indices = @transform_1, window_bounds = array<i64: 2, 1024>}]} {
    %c0 = arith.constant 0 : index
    %c0_0 = arith.constant 0 : index
    %0 = vector.load %arg1[%c0, %c0_0] : memref<2x1024xf32, #tpu.memory_space<vmem>>, vector<2x1024xf32>
    %1 = arith.negf %0 : vector<2x1024xf32>
    %2 = math.exp %1 : vector<2x1024xf32>
    %cst = arith.constant 1.000000e+00 : f32
    %3 = vector.broadcast %cst : f32 to vector<2x1024xf32>
    %4 = arith.addf %3, %2 : vector<2x1024xf32>
    %5 = arith.divf %3, %4 : vector<2x1024xf32>
    %c0_1 = arith.constant 0 : index
    %c0_2 = arith.constant 0 : index
    %6 = vector.load %arg2[%c0_1, %c0_2] : memref<2x1024xf32, #tpu.memory_space<vmem>>, vector<2x1024xf32>
    tpu.vector_store %arg2[%c0_1, %c0_2], %5 {strides = array<i32>} : memref<2x1024xf32, #tpu.memory_space<vmem>>, vector<2x1024xf32>,
    return
  }
  func.func @transform_0(%arg0: i32) -> (i32, i32) {
    %c0_i32 = arith.constant 0 : i32
    %c0_i32_0 = arith.constant 0 : i32
    return %arg0, %c0_i32 : i32, i32
  }
  func.func @transform_1(%arg0: i32) -> (i32, i32) {
    %c0_i32 = arith.constant 0 : i32
    %c0_i32_0 = arith.constant 0 : i32
    return %arg0, %c0_i32 : i32, i32
  }
}

</mosaic_0001>

<llo_original>
// kernel: tpu_custom_call.1
$region0: #{tpu_custom_call.1}
  #allocation0 [shape = 'u32[]', space=smem, size = 0x4, offset = 0x4, fixed_abs, tag = 'smem constant byte address 0x4 - core index']
  #allocation1 [shape = 'u32[144,128]{1,0:T(1,128)}', space=vmem, size = 0x12000, scoped, tag = 'internal scratch']
  %s0 = inlined_call_operand.hbm [shape: f32[2,1024], index: 0, kind: input, shape index: {}]
  %s1 = inlined_call_operand.hbm [shape: f32[2,1024], index: 1, kind: output, shape index: {}]
  %s2 = sld [smem:[#allocation0]]
  $region18: #{tpu_custom_call.1} parent=0
    _
  %s4 = ssub.s32 1, %s2
  %s5 = scalar_select 0, %s4, %s2
  $region1: #{tpu_custom_call.1} parent=0
    #allocation2 [shape = 'u8[8192]{0}', space=vmem, size = 0x2000, scoped, tag = 'input window, operand 0, single buffered']
    #allocation3 [shape = 's32[1]{0}', space=sflag, size = 0x4, scoped, tag = 'scoped memory for tpu_custom_call.1']
    #allocation4 [shape = 's32[1]{0}', space=sflag, size = 0x4, scoped, tag = 'scoped memory for tpu_custom_call.1']
    #allocation5 [shape = 'u8[8192]{0}', space=vmem, size = 0x2000, scoped, tag = 'output window, operand 0, single buffered']
    %6 = vsyncpa [#allocation3], 0
    %7 = vsyncpa [#allocation4], 0
    // Predicated region
    $region2: #{tpu_custom_call.1} parent=1 // pred_check
      _
    $region3: #{tpu_custom_call.1} parent=1 // pred_check_branch
      %9 = sbr.rel (0) target = $region5
    $region4: #{tpu_custom_call.1} parent=1 // pred_region
      %s11 = ssub.s32 256, 256
      %12 = vsyncadd [#allocation3], %s11
      %s14 = sshll.u32 [#allocation2], 4
      %s15 = int_to_ptr.vmem [resolvable:$true] %s14
      %17 = dma.hbm_to_vmem [thread:$0]  %s0, 256, %s15, [#allocation3]
    $region5: #{tpu_custom_call.1} parent=1 // pred_fallthru
      _
    // Predicated region
    $region6: #{tpu_custom_call.1} parent=1 // pred_check
      _
    $region7: #{tpu_custom_call.1} parent=1 // pred_check_branch
      %19 = sbr.rel (0) target = $region9
    $region8: #{tpu_custom_call.1} parent=1 // pred_region
      %20 = dma.done [#allocation3], 256
    $region9: #{tpu_custom_call.1} parent=1 // pred_fallthru
      _
    %v21 = vld [vmem:[#allocation2] sm:$0xff]
    %v22 = vld [vmem:[#allocation2 + $0x8] sm:$0xff]
    %v23 = vxor.u32 %v21, 2147483648
    %v24 = vxor.u32 %v22, 2147483648
    %v25 = vmul.f32 %v23, 1.442695
    %v26 = vpow.pop %v25
    %v27 = vmul.f32 %v24, 1.442695
    %v28 = vpow.pop %v27
    %v29 = vadd.f32 %v26, 1.0
    %v30 = vadd.f32 %v28, 1.0
    %v31 = vrcp.pop %v29
    %v32 = vmul.f32 1.0, %v31
    %v33 = vrcp.pop %v30
    %v34 = vmul.f32 1.0, %v33
    %35 = vst [vmem:[#allocation5] sm:$0xff] %v32
    %36 = vst [vmem:[#allocation5 + $0x8] sm:$0xff] %v34
    // Predicated region
    $region10: #{tpu_custom_call.1} parent=1 // pred_check
      _
    $region11: #{tpu_custom_call.1} parent=1 // pred_check_branch
      %38 = sbr.rel (0) target = $region13
    $region12: #{tpu_custom_call.1} parent=1 // pred_region
      %s40 = ssub.s32 256, 256
      %41 = vsyncadd [#allocation4], %s40
      %s43 = sshll.u32 [#allocation5], 4
      %s44 = int_to_ptr.vmem [resolvable:$true] %s43
      %46 = dma.vmem_to_hbm [thread:$0]  %s44, 256, %s1, [#allocation4]
    $region13: #{tpu_custom_call.1} parent=1 // pred_fallthru
      _
    // Predicated region
    $region14: #{tpu_custom_call.1} parent=1 // pred_check
      _
    $region15: #{tpu_custom_call.1} parent=1 // pred_check_branch
      %48 = sbr.rel (0) target = $region17
    $region16: #{tpu_custom_call.1} parent=1 // pred_region
      %49 = dma.done [#allocation4], 256
    $region17: #{tpu_custom_call.1} parent=1 // pred_fallthru
      _
    %50 = vsyncpa [#allocation3], 1
    %51 = vsyncpa [#allocation4], 1

</llo_original>
